<compile_context>
chip_gen: v5e
topology: v5e:2x2
jax: 0.10.0
libtpu: 0.0.40
codegen_flags: <defaults>
</compile_context>

<pallas_src>
import functools

import jax
import jax.numpy as jnp
import numpy as np
from jax.experimental import pallas as pl
from jax.experimental.pallas import tpu as pltpu

MAX_REL = 128          # max number of relevant (ground-truth) candidates per query
DEFAULT_TILE_N = 8192  # candidate-axis tile (multiple of 128); <= 8192 fits v7x VMEM


def _round_up(x, m):
    return ((x + m - 1) // m) * m


# --------------------------------------------------------------------------- #
# Pallas kernel: relevant-only pairwise ranking + retrieval metrics
# --------------------------------------------------------------------------- #
def _metrics_kernel(scores_ref, relsc_ref, relidx_ref, relval_ref, ones_ref,
                    out_ref, acc_ref, *, k_hit, k_recall, tile_n):
    t = pl.program_id(1)

    @pl.when(t == 0)
    def _init():
        acc_ref[...] = jnp.zeros_like(acc_ref)

    row = scores_ref[...]        # (1, TILE_N)   all candidate scores (pads = -inf)
    col = relsc_ref[...]         # (MAX_REL, 1)  relevant candidate scores
    idx_col = relidx_ref[...]    # (MAX_REL, 1)  relevant candidate positions (int32)

    # global candidate index j of every lane in this tile (stable tie-break);
    # (1, tile_n) only -- broadcasting against idx_col happens inside the compare.
    j = jax.lax.broadcasted_iota(jnp.int32, (1, tile_n), 1) + t * tile_n

    # item j outranks relevant item i if score_j > s_i, or tie broken by index.
    gt = row > col                                            # (MAX_REL, TILE_N)
    tie = jnp.logical_and(row == col, j < idx_col)            # (MAX_REL, TILE_N)
    contrib = jnp.logical_or(gt, tie).astype(jnp.bfloat16)    # exact {0, 1}

    # MXU reduction along the lane axis; f32 accumulation keeps counts exact.
    # ones_ref is a hoisted constant input (DMA'd once, constant index_map).
    acc_ref[...] += jnp.dot(contrib, ones_ref[...],
                            preferred_element_type=jnp.float32)

    @pl.when(t == pl.num_programs(1) - 1)
    def _finalize():
        valid = relval_ref[...]                  # (MAX_REL, 1) {0., 1.}
        rank = acc_ref[:, 0:1] + 1.0             # ref-view slice: (MAX_REL, 1) ranks
        n_rel = jnp.sum(valid)
        big = jnp.float32(1e30)
        rel_rank = jnp.where(valid > 0.5, rank, big)
        best = jnp.min(rel_rank)                 # best (smallest) relevant rank
        has = n_rel > 0.5
        mrr = jnp.where(has, 1.0 / best, 0.0)
        hit = jnp.where(jnp.logical_and(has, best <= k_hit), 1.0, 0.0)
        rec = jnp.where(
            has,
            jnp.sum(valid * (rank <= k_recall).astype(jnp.float32))
            / jnp.maximum(n_rel, 1.0),
            0.0,
        )
        lane = jax.lax.broadcasted_iota(jnp.int32, out_ref.shape, 1)
        out_ref[...] = jnp.where(
            lane == 0, mrr, jnp.where(lane == 1, hit, jnp.where(lane == 2, rec, 0.0))
        )


def _pallas_metrics(all_pred, bool_gd, *, k_hit, k_recall, tile_cap):
    """all_pred: f32[B, N]; bool_gd: bool[B, N] -> f32[B, 3] (mrr, hit@k, recall@k)."""
    assert tile_cap % 128 == 0
    B, n = all_pred.shape
    npad = _round_up(max(n, 128), 128)
    tile_n = min(tile_cap, npad)
    npad = _round_up(npad, tile_n)
    num_tiles = npad // tile_n

    scores = jnp.pad(
        all_pred.astype(jnp.float32), ((0, 0), (0, npad - n)),
        constant_values=float("-inf"),
    ).reshape(B, 1, npad)

    # Gather up to MAX_REL relevant candidate positions per query (fixed size).
    # TODO(synk): queries with > MAX_REL ground-truth answers are truncated.
    def gather_rel(g, s):
        pos, = jnp.where(g, size=MAX_REL, fill_value=-1)
        pos = pos.astype(jnp.int32)
        valid = (pos >= 0)
        safe = jnp.clip(pos, 0, n - 1)
        rel_sc = jnp.where(valid, s[safe], 0.0)
        rel_idx = jnp.where(valid, pos, jnp.int32(2 ** 30))
        return rel_sc, rel_idx, valid.astype(jnp.float32)

    rel_sc, rel_idx, rel_val = jax.vmap(gather_rel)(bool_gd, all_pred)
    rel_sc = rel_sc.reshape(B, MAX_REL, 1)
    rel_idx = rel_idx.reshape(B, MAX_REL, 1)
    rel_val = rel_val.reshape(B, MAX_REL, 1)

    # Hoisted MXU reduction operand (constant; DMA'd once thanks to the
    # constant index_map -- no per-tile re-materialization inside the kernel).
    ones_mat = jnp.ones((tile_n, MAX_REL), jnp.bfloat16)

    out = pl.pallas_call(
        functools.partial(
            _metrics_kernel,
            k_hit=float(k_hit), k_recall=float(k_recall), tile_n=tile_n,
        ),
        out_shape=jax.ShapeDtypeStruct((B, 1, 128), jnp.float32),
        grid=(B, num_tiles),
        in_specs=[
            pl.BlockSpec((None, 1, tile_n), lambda b, t: (b, 0, t)),
            pl.BlockSpec((None, MAX_REL, 1), lambda b, t: (b, 0, 0)),
            pl.BlockSpec((None, MAX_REL, 1), lambda b, t: (b, 0, 0)),
            pl.BlockSpec((None, MAX_REL, 1), lambda b, t: (b, 0, 0)),
            pl.BlockSpec((tile_n, MAX_REL), lambda b, t: (0, 0)),   # constant ones
        ],
        out_specs=pl.BlockSpec((None, 1, 128), lambda b, t: (b, 0, 0)),
        scratch_shapes=[pltpu.VMEM((MAX_REL, 128), jnp.float32)],
        compiler_params=pltpu.CompilerParams(
            dimension_semantics=("parallel", "arbitrary"),
            # tile_n <= 8192 keeps live VMEM (~5 MiB declared + compiler temps)
            # well under this limit on v7x (64 MiB physical); v5e/v6e have 128 MiB.
            vmem_limit_bytes=48 * 1024 * 1024,
        ),
    )(scores, rel_sc, rel_idx, rel_val, ones_mat)
    return out[:, 0, :3]


# --------------------------------------------------------------------------- #
# Fused (jit) scatter/gather glue + metrics kernel
# --------------------------------------------------------------------------- #
@functools.partial(
    jax.jit, static_argnames=("table_size", "k_hit", "k_recall", "tile_cap")
)
def _evaluate_jit(candidate_ids, pred_ids, pred_vals, answer_ids,
                  *, table_size, k_hit, k_recall, tile_cap):
    def dense(pids, pvals, aids):
        fill = jnp.min(pvals) - 1.0
        table = jnp.full((table_size,), fill, jnp.float32).at[pids].set(pvals)
        all_pred = table[candidate_ids]
        gd = jnp.zeros((table_size,), jnp.bool_).at[aids].set(True)
        bool_gd = gd[candidate_ids]
        return all_pred, bool_gd

    all_pred, bool_gd = jax.vmap(dense)(pred_ids, pred_vals, answer_ids)
    return _pallas_metrics(
        all_pred, bool_gd, k_hit=k_hit, k_recall=k_recall, tile_cap=tile_cap
    )


# --------------------------------------------------------------------------- #
# Module wrapper (mirrors the PyTorch class)
# --------------------------------------------------------------------------- #
class ModelForSemiStructQA:
    def __init__(self, candidate_ids, tile_n=DEFAULT_TILE_N):
        self.candidate_ids = jnp.asarray(candidate_ids, dtype=jnp.int32)
        self.num_candidates = int(self.candidate_ids.shape[0])
        # static, hoisted: avoids a device round-trip (jnp.max) per evaluate()
        self._table_size = int(np.max(np.asarray(candidate_ids))) + 1
        self._tile_cap = int(tile_n)

    def forward(self, query, candidates=None, query_id=None, **kwargs):
        # TODO(synk): forward() is abstract in the reference module; nothing to lower.
        raise NotImplementedError

    def evaluate(self, pred_dict, answer_ids, metrics=("mrr", "hit@3", "recall@20")):
        return self.evaluate_batch([pred_dict], [answer_ids], metrics=metrics)[0]

    def evaluate_batch(self, pred_dicts, answer_ids_list,
                       metrics=("mrr", "hit@3", "recall@20")):
        k_hit, k_recall = 3, 20
        for m in metrics:
            if m.startswith("hit@"):
                k_hit = int(m.split("@")[-1])
            elif m.startswith("recall@"):
                k_recall = int(m.split("@")[-1])
            # TODO(synk): rprecision / precision@k / map@k / ndcg@k not implemented.

        B = len(pred_dicts)
        P = max(len(d) for d in pred_dicts)
        A = max(len(np.asarray(a).reshape(-1)) for a in answer_ids_list)

        pred_ids = np.zeros((B, P), np.int32)
        pred_vals = np.zeros((B, P), np.float32)
        ans = np.zeros((B, A), np.int32)
        for b, d in enumerate(pred_dicts):
            ids = np.asarray(list(d.keys()), np.int64).reshape(-1)
            vals = np.asarray(list(d.values()), np.float32).reshape(-1)
            pred_ids[b, :len(ids)] = ids
            pred_ids[b, len(ids):] = ids[0]      # idempotent pad
            pred_vals[b, :len(vals)] = vals
            pred_vals[b, len(vals):] = vals[0]
            a = np.asarray(answer_ids_list[b], np.int64).reshape(-1)
            ans[b, :len(a)] = a
            ans[b, len(a):] = a[0]               # idempotent pad

        mets = _evaluate_jit(
            self.candidate_ids,
            jnp.asarray(pred_ids), jnp.asarray(pred_vals), jnp.asarray(ans),
            table_size=self._table_size, k_hit=k_hit, k_recall=k_recall,
            tile_cap=self._tile_cap,
        )
        jax.block_until_ready(mets)
        mets = np.asarray(mets)

        results = []
        for b in range(B):
            em = {}
            for m in metrics:
                if m == "mrr":
                    em[m] = float(mets[b, 0])
                elif m.startswith("hit@"):
                    em[m] = float(mets[b, 1])
                elif m.startswith("recall@"):
                    em[m] = float(mets[b, 2])
            results.append(em)
        return results


# --------------------------------------------------------------------------- #
# Pure-numpy reference (stable argsort, mirrors torchmetrics semantics)
# --------------------------------------------------------------------------- #
def _ref_dense(candidate_ids, pred_dict, answer_ids):
    table_size = int(candidate_ids.max()) + 1
    pred_ids = np.asarray(list(pred_dict.keys()), np.int64)
    pred = np.asarray(list(pred_dict.values()), np.float32)
    all_pred = np.full((table_size,), pred.min() - 1.0, np.float32)
    all_pred[pred_ids] = pred
    all_pred = all_pred[candidate_ids]
    gd = np.zeros((table_size,), bool)
    gd[np.asarray(answer_ids, np.int64).reshape(-1)] = True
    bool_gd = gd[candidate_ids]
    return all_pred, bool_gd


def _ref_metrics(all_pred, bool_gd, k_hit, k_recall):
    order = np.argsort(-np.asarray(all_pred), kind="stable")
    sg = np.asarray(bool_gd)[order]
    n_rel = int(sg.sum())
    if n_rel == 0:
        return 0.0, 0.0, 0.0
    first = int(np.argmax(sg))
    return 1.0 / (first + 1), float(sg[:k_hit].any()), float(sg[:k_recall].sum() / n_rel)


if __name__ == "__main__":
    key = jax.random.PRNGKey(0)

    num_candidates = 300
    candidate_ids = np.arange(7, 7 + num_candidates)  # non-trivial node-id offset
    # small tile (128) so the multi-tile accumulation path is exercised at small N
    model = ModelForSemiStructQA(candidate_ids, tile_n=128)
    # default-tile model exercises the single-tile (tile_n == npad) path
    model_big = ModelForSemiStructQA(candidate_ids)

    B = 3
    keys = jax.random.split(key, B)
    pred_dicts, answer_lists = [], []

    # queries 0 & 1: every candidate scored
    for b in range(2):
        sc = np.asarray(jax.random.normal(keys[b], (num_candidates,), dtype=jnp.float32))
        pred_dicts.append({int(c): float(s) for c, s in zip(candidate_ids, sc)})
    answer_lists.append([12, 40, 85])
    answer_lists.append([7, 200])

    # query 2: only a subset scored; one answer unscored (exercises tie handling)
    sc2 = np.asarray(jax.random.normal(keys[2], (num_candidates,), dtype=jnp.float32))
    pred_dicts.append({int(c): float(s) for c, s in zip(candidate_ids[:200], sc2[:200])})
    answer_lists.append([30, 7 + 250])

    results = model.evaluate_batch(
        pred_dicts, answer_lists, metrics=["mrr", "hit@3", "recall@20"]
    )
    single = model.evaluate(pred_dicts[0], answer_lists[0])
    single_big = model_big.evaluate(pred_dicts[0], answer_lists[0])

    for b in range(B):
        ap, gd = _ref_dense(candidate_ids, pred_dicts[b], answer_lists[b])
        mrr_r, hit_r, rec_r = _ref_metrics(ap, gd, 3, 20)
        np.testing.assert_allclose(results[b]["mrr"], mrr_r, rtol=1e-5, atol=1e-6)
        np.testing.assert_allclose(results[b]["hit@3"], hit_r, rtol=1e-5, atol=1e-6)
        np.testing.assert_allclose(results[b]["recall@20"], rec_r, rtol=1e-5, atol=1e-6)
    np.testing.assert_allclose(single["mrr"], results[0]["mrr"], rtol=1e-6)
    np.testing.assert_allclose(single_big["mrr"], results[0]["mrr"], rtol=1e-6)
    np.testing.assert_allclose(single_big["recall@20"], results[0]["recall@20"], rtol=1e-6)

    print("KERNEL_OK")
</pallas_src>

<mosaic_0001>
module attributes {stable_mosaic.version = 11 : i64} {
  func.func @_metrics_kernel(%arg0: i32, %arg1: i32, %arg2: memref<1x1x128xf32, #tpu.memory_space<vmem>>, %arg3: memref<1x128x1xf32, #tpu.memory_space<vmem>>, %arg4: memref<1x128x1xi32, #tpu.memory_space<vmem>>, %arg5: memref<1x128x1xf32, #tpu.memory_space<vmem>>, %arg6: memref<128x128xbf16, #tpu.memory_space<vmem>>, %arg7: memref<1x1x128xf32, #tpu.memory_space<vmem>>, %arg8: memref<128x128xf32, #tpu.memory_space<vmem>>) attributes {dimension_semantics = [#tpu.dimension_semantics<parallel>, #tpu.dimension_semantics<arbitrary>], iteration_bounds = array<i64: 3, 3>, scalar_prefetch = 0 : i64, scratch_operands = 1 : i64, tpu.core_type = #tpu.core_type<tc>, window_params = [{transform_indices = @transform_0, window_bounds = array<i64: 1, 1, 128>}, {transform_indices = @transform_1, window_bounds = array<i64: 1, 128, 1>}, {transform_indices = @transform_2, window_bounds = array<i64: 1, 128, 1>}, {transform_indices = @transform_3, window_bounds = array<i64: 1, 128, 1>}, {pipeline_mode = #tpu.pipeline_mode<synchronous>, transform_indices = @transform_4, window_bounds = array<i64: 128, 128>}, {transform_indices = @transform_5, window_bounds = array<i64: 1, 1, 128>}]} {
    %c0_i32 = arith.constant 0 : i32
    %0 = arith.cmpi eq, %arg1, %c0_i32 : i32
    %1 = arith.extui %0 : i1 to i32
    %c0_i32_0 = arith.constant 0 : i32
    %2 = arith.cmpi ne, %1, %c0_i32_0 : i32
    scf.if %2 {
      %cst_16 = arith.constant 0.000000e+00 : f32
      %35 = vector.broadcast %cst_16 : f32 to vector<128x128xf32>
      %c0_17 = arith.constant 0 : index
      %c0_18 = arith.constant 0 : index
      %36 = vector.load %arg8[%c0_17, %c0_18] : memref<128x128xf32, #tpu.memory_space<vmem>>, vector<128x128xf32>
      tpu.vector_store %arg8[%c0_17, %c0_18], %35 {strides = array<i32>} : memref<128x128xf32, #tpu.memory_space<vmem>>, vector<128x128xf32>,
    } else {
    }
    %c0 = arith.constant 0 : index
    %c0_1 = arith.constant 0 : index
    %c0_2 = arith.constant 0 : index
    %3 = vector.load %arg2[%c0, %c0_1, %c0_2] : memref<1x1x128xf32, #tpu.memory_space<vmem>>, vector<1x1x128xf32>
    %4 = vector.shape_cast %3 : vector<1x1x128xf32> to vector<1x128xf32>
    %c0_3 = arith.constant 0 : index
    %c0_4 = arith.constant 0 : index
    %c0_5 = arith.constant 0 : index
    %5 = vector.load %arg3[%c0_3, %c0_4, %c0_5] : memref<1x128x1xf32, #tpu.memory_space<vmem>>, vector<1x128x1xf32>
    %6 = vector.shape_cast %5 : vector<1x128x1xf32> to vector<128x1xf32>
    %c0_6 = arith.constant 0 : index
    %c0_7 = arith.constant 0 : index
    %c0_8 = arith.constant 0 : index
    %7 = vector.load %arg4[%c0_6, %c0_7, %c0_8] : memref<1x128x1xi32, #tpu.memory_space<vmem>>, vector<1x128x1xi32>
    %8 = vector.shape_cast %7 : vector<1x128x1xi32> to vector<128x1xi32>
    %9 = tpu.iota {dimensions = array<i32: 1>} : vector<1x128xi32>
    %c128_i32 = arith.constant 128 : i32
    %10 = arith.muli %arg1, %c128_i32 : i32
    %11 = vector.broadcast %10 : i32 to vector<1x128xi32>
    %12 = arith.addi %9, %11 : vector<1x128xi32>
    %13 = vector.broadcast %4 : vector<1x128xf32> to vector<128x128xf32>
    %14 = vector.broadcast %6 : vector<128x1xf32> to vector<128x128xf32>
    %15 = arith.cmpf ogt, %13, %14 : vector<128x128xf32>
    %16 = vector.broadcast %4 : vector<1x128xf32> to vector<128x128xf32>
    %17 = vector.broadcast %6 : vector<128x1xf32> to vector<128x128xf32>
    %18 = arith.cmpf oeq, %16, %17 : vector<128x128xf32>
    %19 = vector.broadcast %12 : vector<1x128xi32> to vector<128x128xi32>
    %20 = vector.broadcast %8 : vector<128x1xi32> to vector<128x128xi32>
    %21 = arith.cmpi slt, %19, %20 : vector<128x128xi32>
    %22 = arith.andi %18, %21 : vector<128x128xi1>
    %23 = arith.ori %15, %22 : vector<128x128xi1>
    %24 = arith.extui %23 : vector<128x128xi1> to vector<128x128xi32>
    %25 = arith.sitofp %24 : vector<128x128xi32> to vector<128x128xf32>
    %26 = arith.truncf %25 : vector<128x128xf32> to vector<128x128xbf16>
    %c0_9 = arith.constant 0 : index
    %c0_10 = arith.constant 0 : index
    %27 = vector.load %arg8[%c0_9, %c0_10] : memref<128x128xf32, #tpu.memory_space<vmem>>, vector<128x128xf32>
    %c0_11 = arith.constant 0 : index
    %c0_12 = arith.constant 0 : index
    %28 = vector.load %arg6[%c0_11, %c0_12] : memref<128x128xbf16, #tpu.memory_space<vmem>>, vector<128x128xbf16>
    %cst = arith.constant dense<0.000000e+00> : vector<128x128xf32>
    %29 = tpu.matmul %26, %28, %cst {dimension_numbers = #tpu.dot_dimension_numbers<[1], [0], [0], [1], [0, 0, 1, 1], [], []>} : vector<128x128xbf16>, vector<128x128xbf16>, vector<128x128xf32> -> vector<128x128xf32>
    %30 = arith.addf %27, %29 : vector<128x128xf32>
    %c0_13 = arith.constant 0 : index
    %c0_14 = arith.constant 0 : index
    %31 = vector.load %arg8[%c0_13, %c0_14] : memref<128x128xf32, #tpu.memory_space<vmem>>, vector<128x128xf32>
    tpu.vector_store %arg8[%c0_13, %c0_14], %30 {strides = array<i32>} : memref<128x128xf32, #tpu.memory_space<vmem>>, vector<128x128xf32>,
    %c2_i32 = arith.constant 2 : i32
    %32 = arith.cmpi eq, %arg1, %c2_i32 : i32
    %33 = arith.extui %32 : i1 to i32
    %c0_i32_15 = arith.constant 0 : i32
    %34 = arith.cmpi ne, %33, %c0_i32_15 : i32
    scf.if %34 {
      %c0_16 = arith.constant 0 : index
      %c0_17 = arith.constant 0 : index
      %c0_18 = arith.constant 0 : index
      %35 = vector.load %arg5[%c0_16, %c0_17, %c0_18] : memref<1x128x1xf32, #tpu.memory_space<vmem>>, vector<1x128x1xf32>
      %36 = vector.shape_cast %35 : vector<1x128x1xf32> to vector<128x1xf32>
      %c0_19 = arith.constant 0 : index
      %c0_20 = arith.constant 0 : index
      %37 = vector.load %arg8[%c0_19, %c0_20] : memref<128x128xf32, #tpu.memory_space<vmem>>, vector<128x1xf32>
      %cst_21 = arith.constant 1.000000e+00 : f32
      %38 = vector.broadcast %cst_21 : f32 to vector<128x1xf32>
      %39 = arith.addf %37, %38 : vector<128x1xf32>
      %40 = vector.shape_cast %36 : vector<128x1xf32> to vector<1x128x1xf32>
      %cst_22 = arith.constant dense<0.000000e+00> : vector<1xf32>
      %41 = vector.multi_reduction <add>, %40, %cst_22 [1, 2] : vector<1x128x1xf32> to vector<1xf32>
      %42 = vector.shape_cast %41 : vector<1xf32> to vector<1x1x1xf32>
      %43 = vector.extract %42[0, 0, 0] : f32 from vector<1x1x1xf32>
      %cst_23 = arith.constant 5.000000e-01 : f32
      %44 = vector.broadcast %cst_23 : f32 to vector<128x1xf32>
      %45 = arith.cmpf ogt, %36, %44 : vector<128x1xf32>
      %cst_24 = arith.constant 1.000000e+30 : f32
      %46 = vector.broadcast %cst_24 : f32 to vector<128x1xf32>
      %47 = arith.select %45, %39, %46 : vector<128x1xi1>, vector<128x1xf32>
      %48 = vector.shape_cast %47 : vector<128x1xf32> to vector<1x128x1xf32>
      %cst_25 = arith.constant dense<0x7F800000> : vector<1xf32>
      %49 = vector.multi_reduction <minimumf>, %48, %cst_25 [1, 2] : vector<1x128x1xf32> to vector<1xf32>
      %50 = vector.shape_cast %49 : vector<1xf32> to vector<1x1x1xf32>
      %51 = vector.extract %50[0, 0, 0] : f32 from vector<1x1x1xf32>
      %cst_26 = arith.constant 5.000000e-01 : f32
      %52 = arith.cmpf ogt, %43, %cst_26 : f32
      %cst_27 = arith.constant 1.000000e+00 : f32
      %53 = arith.divf %cst_27, %51 : f32
      %cst_28 = arith.constant 0.000000e+00 : f32
      %54 = arith.select %52, %53, %cst_28 : f32
      %cst_29 = arith.constant 3.000000e+00 : f32
      %55 = arith.cmpf ole, %51, %cst_29 : f32
      %56 = arith.andi %52, %55 : i1
      %cst_30 = arith.constant 1.000000e+00 : f32
      %cst_31 = arith.constant 0.000000e+00 : f32
      %57 = arith.select %56, %cst_30, %cst_31 : f32
      %cst_32 = arith.constant 2.000000e+01 : f32
      %58 = vector.broadcast %cst_32 : f32 to vector<128x1xf32>
      %59 = arith.cmpf ole, %39, %58 : vector<128x1xf32>
      %60 = arith.extui %59 : vector<128x1xi1> to vector<128x1xi32>
      %61 = arith.sitofp %60 : vector<128x1xi32> to vector<128x1xf32>
      %62 = arith.mulf %36, %61 : vector<128x1xf32>
      %63 = vector.shape_cast %62 : vector<128x1xf32> to vector<1x128x1xf32>
      %cst_33 = arith.constant dense<0.000000e+00> : vector<1xf32>
      %64 = vector.multi_reduction <add>, %63, %cst_33 [1, 2] : vector<1x128x1xf32> to vector<1xf32>
      %65 = vector.shape_cast %64 : vector<1xf32> to vector<1x1x1xf32>
      %66 = vector.extract %65[0, 0, 0] : f32 from vector<1x1x1xf32>
      %cst_34 = arith.constant 1.000000e+00 : f32
      %67 = arith.maximumf %43, %cst_34 : f32
      %68 = arith.divf %66, %67 : f32
      %cst_35 = arith.constant 0.000000e+00 : f32
      %69 = arith.select %52, %68, %cst_35 : f32
      %70 = tpu.iota {dimensions = array<i32: 1>} : vector<1x128xi32>
      %c0_i32_36 = arith.constant 0 : i32
      %71 = vector.broadcast %c0_i32_36 : i32 to vector<1x128xi32>
      %72 = arith.cmpi eq, %70, %71 : vector<1x128xi32>
      %c1_i32 = arith.constant 1 : i32
      %73 = vector.broadcast %c1_i32 : i32 to vector<1x128xi32>
      %74 = arith.cmpi eq, %70, %73 : vector<1x128xi32>
      %c2_i32_37 = arith.constant 2 : i32
      %75 = vector.broadcast %c2_i32_37 : i32 to vector<1x128xi32>
      %76 = arith.cmpi eq, %70, %75 : vector<1x128xi32>
      %cst_38 = arith.constant 0.000000e+00 : f32
      %77 = vector.broadcast %69 : f32 to vector<1x128xf32>
      %78 = vector.broadcast %cst_38 : f32 to vector<1x128xf32>
      %79 = arith.select %76, %77, %78 : vector<1x128xi1>, vector<1x128xf32>
      %80 = vector.broadcast %57 : f32 to vector<1x128xf32>
      %81 = arith.select %74, %80, %79 : vector<1x128xi1>, vector<1x128xf32>
      %82 = vector.broadcast %54 : f32 to vector<1x128xf32>
      %83 = arith.select %72, %82, %81 : vector<1x128xi1>, vector<1x128xf32>
      %c0_39 = arith.constant 0 : index
      %c0_40 = arith.constant 0 : index
      %c0_41 = arith.constant 0 : index
      %84 = vector.load %arg7[%c0_39, %c0_40, %c0_41] : memref<1x1x128xf32, #tpu.memory_space<vmem>>, vector<1x1x128xf32>
      %85 = vector.shape_cast %84 : vector<1x1x128xf32> to vector<1x128xf32>
      %86 = vector.shape_cast %83 : vector<1x128xf32> to vector<1x1x128xf32>
      tpu.vector_store %arg7[%c0_39, %c0_40, %c0_41], %86 {strides = array<i32>} : memref<1x1x128xf32, #tpu.memory_space<vmem>>, vector<1x1x128xf32>,
    } else {
    }
    return
  }
  func.func @transform_0(%arg0: i32, %arg1: i32) -> (i32, i32, i32) {
    %c0_i32 = arith.constant 0 : i32
    %c0_i32_0 = arith.constant 0 : i32
    return %arg0, %c0_i32, %arg1 : i32, i32, i32
  }
  func.func @transform_1(%arg0: i32, %arg1: i32) -> (i32, i32, i32) {
    %c0_i32 = arith.constant 0 : i32
    %c0_i32_0 = arith.constant 0 : i32
    %c0_i32_1 = arith.constant 0 : i32
    return %arg0, %c0_i32, %c0_i32_0 : i32, i32, i32
  }
  func.func @transform_2(%arg0: i32, %arg1: i32) -> (i32, i32, i32) {
    %c0_i32 = arith.constant 0 : i32
    %c0_i32_0 = arith.constant 0 : i32
    %c0_i32_1 = arith.constant 0 : i32
    return %arg0, %c0_i32, %c0_i32_0 : i32, i32, i32
  }
  func.func @transform_3(%arg0: i32, %arg1: i32) -> (i32, i32, i32) {
    %c0_i32 = arith.constant 0 : i32
    %c0_i32_0 = arith.constant 0 : i32
    %c0_i32_1 = arith.constant 0 : i32
    return %arg0, %c0_i32, %c0_i32_0 : i32, i32, i32
  }
  func.func @transform_4(%arg0: i32, %arg1: i32) -> (i32, i32) {
    %c0_i32 = arith.constant 0 : i32
    %c0_i32_0 = arith.constant 0 : i32
    %c0_i32_1 = arith.constant 0 : i32
    return %c0_i32, %c0_i32_0 : i32, i32
  }
  func.func @transform_5(%arg0: i32, %arg1: i32) -> (i32, i32, i32) {
    %c0_i32 = arith.constant 0 : i32
    %c0_i32_0 = arith.constant 0 : i32
    %c0_i32_1 = arith.constant 0 : i32
    return %arg0, %c0_i32, %c0_i32_0 : i32, i32, i32
  }
}

</mosaic_0001>

<llo_original>
// kernel: _evaluate_jit.1
$region0: #{_evaluate_jit.1}
  #allocation0 [shape = 'u32[]', space=smem, size = 0x4, offset = 0x4, fixed_abs, tag = 'smem constant byte address 0x4 - core index']
  #allocation1 [shape = 'u32[72,128]{1,0:T(1,128)}', space=vmem, size = 0x9000, scoped, tag = 'internal scratch']
  #allocation2 [shape = 'f32[128,128]{1,0:T(8,128)}', space=vmem, size = 0x10000, scoped, tag = 'scratch operand']
  %s0 = inlined_call_operand.vmem [shape: f32[3,1,384], index: 0, kind: input, shape index: {}]
  %s1 = inlined_call_operand.vmem [shape: f32[3,128,1], index: 1, kind: input, shape index: {}]
  %s2 = inlined_call_operand.vmem [shape: s32[3,128,1], index: 2, kind: input, shape index: {}]
  %s3 = inlined_call_operand.vmem [shape: f32[3,128,1], index: 3, kind: input, shape index: {}]
  %s4 = inlined_call_operand.vmem [shape: bf16[128,128], index: 4, kind: input, shape index: {}]
  %s5 = inlined_call_operand.vmem [shape: f32[3,1,128], index: 5, kind: output, shape index: {}]
  %s6 = sld [smem:[#allocation0]]
  $region61: #{_evaluate_jit.1} parent=0
    _
  %s8 = ssub.s32 1, %s6
  %s9 = scalar_select 0, %s8, %s6
  loop: start=0, step=1, limit=11
  $region2: #{_evaluate_jit.1} parent=0 // loop_pre_header
    _
  $region3: #{_evaluate_jit.1} parent=0 // loop_header
    %s11 = sphi 0, %s15
    %p12 = scmp.ge.s32.totalorder %s11, 11
    %s18 = sphi 0, %s30
    %s19 = sphi 0, %s26
    %s20 = sphi 0, %s18
    %s21 = sphi 0, %s19
    %s22 = sphi 0, %s20
    %s23 = sphi 0, %s21
    %s35 = sphi 0, %s37
    %s38 = sphi 0, %s35
    %s39 = sphi 0, %s38
    %s55 = sphi 0, %s39
    %s61 = sphi 0, %s63
    %s64 = sphi 0, %s61
    %s65 = sphi 0, %s64
    %s81 = sphi 0, %s65
    %s87 = sphi 0, %s89
    %s90 = sphi 0, %s87
    %s91 = sphi 0, %s90
    %s107 = sphi 0, %s91
    %s113 = sphi 0, %s115
    %s116 = sphi 0, %s113
    %s117 = sphi 0, %s116
    %s133 = sphi 0, %s117
    %s137 = sphi 0, %s137
    %s139 = sphi 0, %s137
    %s140 = sphi 0, %s139
    %s154 = sphi 0, %s140
    %s160 = sphi 0, %s162
    %s163 = sphi 0, %s160
    %s164 = sphi 0, %s163
    %s180 = sphi 0, %s164
  $region4: #{_evaluate_jit.1} parent=0 // loop_header_branch
    %14 = sbr.rel (%p12) target = $region8
  $region5: #{_evaluate_jit.1} parent=0 // loop_body
    %s16 = ssub.s32 %s11, 1
    %s17 = ssub.s32 %s11, 2
    %s24 = sadd.s32 1, %s19
    %p25 = scmp.ge.s32.totalorder %s24, 3
    %s26 = scalar_select %p25, 0, %s24
    %s27 = sadd.s32 1, %s18
    %s28 = scalar_select %p25, %s27, %s18
    %p29 = scmp.ge.s32.totalorder %s28, 3
    %s30 = scalar_select %p29, 0, %s28
    %s31 = ssub.s32 %s18, %s30
    %s32 = ssub.s32 %s19, %s26
    %s33 = sor.u32 %s31, %s32
    %p34 = scmp.eq.s32.totalorder %s33, 0
    %s36 = sadd.s32 %s35, 1
    %s37 = scalar_select %p34, %s35, %s36
    %p40 = pneg %p34
    %p41 = scmp.eq.s32.totalorder %s11, 8
    %p42 = por %p40, %p41
    %p43 = scmp.ne.s32.totalorder %s35, %s38
    %p44 = scmp.eq.s32.totalorder %s11, 0
    %p45 = por %p43, %p44
    %p46 = scmp.ne.s32.totalorder %s35, %s38
    %p47 = scmp.eq.s32.totalorder %s16, 8
    %p48 = por %p46, %p47
    %p49 = scmp.ne.s32.totalorder %s38, %s39
    %p50 = scmp.eq.s32.totalorder %s16, 0
    %p51 = por %p49, %p50
    %p52 = scmp.ne.s32.totalorder %s38, %s39
    %p53 = scmp.eq.s32.totalorder %s17, 8
    %p54 = por %p52, %p53
    %p56 = scmp.ne.s32.totalorder %s39, %s55
    %p57 = scmp.eq.s32.totalorder %s17, 0
    %p58 = por %p56, %p57
    %s59 = ssub.s32 %s18, %s30
    %p60 = scmp.eq.s32.totalorder %s59, 0
    %s62 = sadd.s32 %s61, 1
    %s63 = scalar_select %p60, %s61, %s62
    %p66 = pneg %p60
    %p67 = scmp.eq.s32.totalorder %s11, 8
    %p68 = por %p66, %p67
    %p69 = scmp.ne.s32.totalorder %s61, %s64
    %p70 = scmp.eq.s32.totalorder %s11, 0
    %p71 = por %p69, %p70
    %p72 = scmp.ne.s32.totalorder %s61, %s64
    %p73 = scmp.eq.s32.totalorder %s16, 8
    %p74 = por %p72, %p73
    %p75 = scmp.ne.s32.totalorder %s64, %s65
    %p76 = scmp.eq.s32.totalorder %s16, 0
    %p77 = por %p75, %p76
    %p78 = scmp.ne.s32.totalorder %s64, %s65
    %p79 = scmp.eq.s32.totalorder %s17, 8
    %p80 = por %p78, %p79
    %p82 = scmp.ne.s32.totalorder %s65, %s81
    %p83 = scmp.eq.s32.totalorder %s17, 0
    %p84 = por %p82, %p83
    %s85 = ssub.s32 %s18, %s30
    %p86 = scmp.eq.s32.totalorder %s85, 0
    %s88 = sadd.s32 %s87, 1
    %s89 = scalar_select %p86, %s87, %s88
    %p92 = pneg %p86
    %p93 = scmp.eq.s32.totalorder %s11, 8
    %p94 = por %p92, %p93
    %p95 = scmp.ne.s32.totalorder %s87, %s90
    %p96 = scmp.eq.s32.totalorder %s11, 0
    %p97 = por %p95, %p96
    %p98 = scmp.ne.s32.totalorder %s87, %s90
    %p99 = scmp.eq.s32.totalorder %s16, 8
    %p100 = por %p98, %p99
    %p101 = scmp.ne.s32.totalorder %s90, %s91
    %p102 = scmp.eq.s32.totalorder %s16, 0
    %p103 = por %p101, %p102
    %p104 = scmp.ne.s32.totalorder %s90, %s91
    %p105 = scmp.eq.s32.totalorder %s17, 8
    %p106 = por %p104, %p105
    %p108 = scmp.ne.s32.totalorder %s91, %s107
    %p109 = scmp.eq.s32.totalorder %s17, 0
    %p110 = por %p108, %p109
    %s111 = ssub.s32 %s18, %s30
    %p112 = scmp.eq.s32.totalorder %s111, 0
    %s114 = sadd.s32 %s113, 1
    %s115 = scalar_select %p112, %s113, %s114
    %p118 = pneg %p112
    %p119 = scmp.eq.s32.totalorder %s11, 8
    %p120 = por %p118, %p119
    %p121 = scmp.ne.s32.totalorder %s113, %s116
    %p122 = scmp.eq.s32.totalorder %s11, 0
    %p123 = por %p121, %p122
    %p124 = scmp.ne.s32.totalorder %s113, %s116
    %p125 = scmp.eq.s32.totalorder %s16, 8
    %p126 = por %p124, %p125
    %p127 = scmp.ne.s32.totalorder %s116, %s117
    %p128 = scmp.eq.s32.totalorder %s16, 0
    %p129 = por %p127, %p128
    %p130 = scmp.ne.s32.totalorder %s116, %s117
    %p131 = scmp.eq.s32.totalorder %s17, 8
    %p132 = por %p130, %p131
    %p134 = scmp.ne.s32.totalorder %s117, %s133
    %p135 = scmp.eq.s32.totalorder %s17, 0
    %p136 = por %p134, %p135
    %s138 = sadd.s32 %s137, 1
    %p141 = scmp.eq.s32.totalorder %s11, 8
    %p142 = scmp.ne.s32.totalorder %s137, %s139
    %p143 = scmp.eq.s32.totalorder %s11, 0
    %p144 = por %p142, %p143
    %p145 = scmp.ne.s32.totalorder %s137, %s139
    %p146 = scmp.eq.s32.totalorder %s16, 8
    %p147 = por %p145, %p146
    %p148 = scmp.ne.s32.totalorder %s139, %s140
    %p149 = scmp.eq.s32.totalorder %s16, 0
    %p150 = por %p148, %p149
    %p151 = scmp.ne.s32.totalorder %s139, %s140
    %p152 = scmp.eq.s32.totalorder %s17, 8
    %p153 = por %p151, %p152
    %p155 = scmp.ne.s32.totalorder %s140, %s154
    %p156 = scmp.eq.s32.totalorder %s17, 0
    %p157 = por %p155, %p156
    %s158 = ssub.s32 %s18, %s30
    %p159 = scmp.eq.s32.totalorder %s158, 0
    %s161 = sadd.s32 %s160, 1
    %s162 = scalar_select %p159, %s160, %s161
    %p165 = pneg %p159
    %p166 = scmp.eq.s32.totalorder %s11, 8
    %p167 = por %p165, %p166
    %p168 = scmp.ne.s32.totalorder %s160, %s163
    %p169 = scmp.eq.s32.totalorder %s11, 0
    %p170 = por %p168, %p169
    %p171 = scmp.ne.s32.totalorder %s160, %s163
    %p172 = scmp.eq.s32.totalorder %s16, 8
    %p173 = por %p171, %p172
    %p174 = scmp.ne.s32.totalorder %s163, %s164
    %p175 = scmp.eq.s32.totalorder %s16, 0
    %p176 = por %p174, %p175
    %p177 = scmp.ne.s32.totalorder %s163, %s164
    %p178 = scmp.eq.s32.totalorder %s17, 8
    %p179 = por %p177, %p178
    %p181 = scmp.ne.s32.totalorder %s164, %s180
    %p182 = scmp.eq.s32.totalorder %s17, 0
    %p183 = por %p181, %p182
    %p184 = scmp.le.s32.totalorder 1, %s11
    %p185 = scmp.lt.s32.totalorder %s11, 10
    %p186 = pnand %p184, %p185
    %p187 = pneg %p186
    // Predicated region
    $region9: #{_evaluate_jit.1} parent=5 // pred_check
      _
    $region10: #{_evaluate_jit.1} parent=5 // pred_check_branch
      %189 = sbr.rel (%p186) target = $region12
    $region11: #{_evaluate_jit.1} parent=5 // pred_region
      %s190 = ssub.s32 %s11, 1
      // Predicated region
      $region13: #{_evaluate_jit.1} parent=11 // pred_check
        %p191 = pneg %p150
      $region14: #{_evaluate_jit.1} parent=11 // pred_check_branch
        %193 = sbr.rel (%p191) target = $region16
      $region15: #{_evaluate_jit.1} parent=11 // pred_region
        _
      $region16: #{_evaluate_jit.1} parent=11 // pred_fallthru
        _
    $region12: #{_evaluate_jit.1} parent=5 // pred_fallthru
      _
    %p194 = scmp.lt.s32.totalorder %s11, 9
    // Predicated region
    $region17: #{_evaluate_jit.1} parent=5 // pred_check
      %p195 = pneg %p194
    $region18: #{_evaluate_jit.1} parent=5 // pred_check_branch
      %197 = sbr.rel (%p195) target = $region20
    $region19: #{_evaluate_jit.1} parent=5 // pred_region
      // Predicated region
      $region21: #{_evaluate_jit.1} parent=19 // pred_check
        %p198 = pneg %p45
      $region22: #{_evaluate_jit.1} parent=19 // pred_check_branch
        %200 = sbr.rel (%p198) target = $region24
      $region23: #{_evaluate_jit.1} parent=19 // pred_region
        %p201 = scmp.lt.s32.totalorder %s18, 2
        %s202 = scalar_select %p201, %s18, 2
        %p203 = scmp.lt.s32.totalorder %s19, 2
        %s204 = scalar_select %p203, %s19, 2
        %s205 = smul.addr %s202, 3
        %s206 = sadd.s32 %s204, %s205
        %s207 = scalar_lea.vmem %s0, %s206
      $region24: #{_evaluate_jit.1} parent=19 // pred_fallthru
        _
      // Predicated region
      $region25: #{_evaluate_jit.1} parent=19 // pred_check
        %p208 = pneg %p71
      $region26: #{_evaluate_jit.1} parent=19 // pred_check_branch
        %210 = sbr.rel (%p208) target = $region28
      $region27: #{_evaluate_jit.1} parent=19 // pred_region
        %p211 = scmp.lt.s32.totalorder %s18, 2
        %s212 = scalar_select %p211, %s18, 2
        %s213 = smul.addr %s212, 16
        %s214 = smul.addr %s213, 8
        %s215 = scalar_lea.vmem %s1, %s214
      $region28: #{_evaluate_jit.1} parent=19 // pred_fallthru
        _
      // Predicated region
      $region29: #{_evaluate_jit.1} parent=19 // pred_check
        %p216 = pneg %p97
      $region30: #{_evaluate_jit.1} parent=19 // pred_check_branch
        %218 = sbr.rel (%p216) target = $region32
      $region31: #{_evaluate_jit.1} parent=19 // pred_region
        %p219 = scmp.lt.s32.totalorder %s18, 2
        %s220 = scalar_select %p219, %s18, 2
        %s221 = smul.addr %s220, 16
        %s222 = smul.addr %s221, 8
        %s223 = scalar_lea.vmem %s2, %s222
      $region32: #{_evaluate_jit.1} parent=19 // pred_fallthru
        _
      // Predicated region
      $region33: #{_evaluate_jit.1} parent=19 // pred_check
        %p224 = pneg %p123
      $region34: #{_evaluate_jit.1} parent=19 // pred_check_branch
        %226 = sbr.rel (%p224) target = $region36
      $region35: #{_evaluate_jit.1} parent=19 // pred_region
        %p227 = scmp.lt.s32.totalorder %s18, 2
        %s228 = scalar_select %p227, %s18, 2
        %s229 = smul.addr %s228, 16
        %s230 = smul.addr %s229, 8
        %s231 = scalar_lea.vmem %s3, %s230
      $region36: #{_evaluate_jit.1} parent=19 // pred_fallthru
        _
    $region20: #{_evaluate_jit.1} parent=5 // pred_fallthru
      _
    %p232 = scmp.le.s32.totalorder 1, %s11
    %p233 = scmp.lt.s32.totalorder %s11, 10
    %p234 = pnand %p232, %p233
    %p235 = pneg %p234
    // Predicated region
    $region37: #{_evaluate_jit.1} parent=5 // pred_check
      _
    $region38: #{_evaluate_jit.1} parent=5 // pred_check_branch
      %237 = sbr.rel (%p234) target = $region40
    $region39: #{_evaluate_jit.1} parent=5 // pred_region
      %s238 = ssub.s32 %s11, 1
      %p239 = scmp.lt.s32.totalorder %s20, 2
      %s240 = scalar_select %p239, %s20, 2
      %p241 = scmp.lt.s32.totalorder %s21, 2
      %s242 = scalar_select %p241, %s21, 2
      %s243 = smul.addr %s240, 3
      %s244 = sadd.s32 %s242, %s243
      %s245 = scalar_lea.vmem %s0, %s244
      %p246 = pneg %p51
      %p247 = pneg %p48
      %p248 = scmp.lt.s32.totalorder %s20, 2
      %s249 = scalar_select %p248, %s20, 2
      %s250 = smul.addr %s249, 16
      %s251 = smul.addr %s250, 8
      %s252 = scalar_lea.vmem %s1, %s251
      %p253 = pneg %p77
      %p254 = pneg %p74
      %p255 = scmp.lt.s32.totalorder %s20, 2
      %s256 = scalar_select %p255, %s20, 2
      %s257 = smul.addr %s256, 16
      %s258 = smul.addr %s257, 8
      %s259 = scalar_lea.vmem %s2, %s258
      %p260 = pneg %p103
      %p261 = pneg %p100
      %p262 = scmp.lt.s32.totalorder %s20, 2
      %s263 = scalar_select %p262, %s20, 2
      %s264 = smul.addr %s263, 16
      %s265 = smul.addr %s264, 8
      %s266 = scalar_lea.vmem %s3, %s265
      %p267 = pneg %p129
      %p268 = pneg %p126
      %p269 = pneg %p150
      %p270 = pneg %p147
      %p271 = pneg %p176
      %p272 = pneg %p173
      %p273 = scmp.lt.s32.totalorder %s20, 2
      %s274 = scalar_select %p273, %s20, 2
      %s275 = scalar_lea.vmem %s5, %s274
      %p276 = scmp.lt.s32.totalorder %s20, 2
      %s277 = scalar_select %p276, %s20, 2
      %p278 = scmp.lt.s32.totalorder %s21, 2
      %s279 = scalar_select %p278, %s21, 2
      %s280 = smul.addr %s277, 3
      %s281 = sadd.s32 %s279, %s280
      %s282 = scalar_lea.vmem %s0, %s281
      %p283 = scmp.lt.s32.totalorder %s20, 2
      %s284 = scalar_select %p283, %s20, 2
      %s285 = smul.addr %s284, 16
      %s286 = smul.addr %s285, 8
      %s287 = scalar_lea.vmem %s1, %s286
      %p288 = scmp.lt.s32.totalorder %s20, 2
      %s289 = scalar_select %p288, %s20, 2
      %s290 = smul.addr %s289, 16
      %s291 = smul.addr %s290, 8
      %s292 = scalar_lea.vmem %s2, %s291
      %p293 = scmp.lt.s32.totalorder %s20, 2
      %s294 = scalar_select %p293, %s20, 2
      %s295 = smul.addr %s294, 16
      %s296 = smul.addr %s295, 8
      %s297 = scalar_lea.vmem %s3, %s296
      %p298 = scmp.lt.s32.totalorder %s20, 2
      %s299 = scalar_select %p298, %s20, 2
      %s300 = scalar_lea.vmem %s5, %s299
      %p301 = scmp.eq.s32.totalorder %s21, 0
      // Predicated region
      $region41: #{_evaluate_jit.1} parent=39 // pred_check
        %p302 = pneg %p301
      $region42: #{_evaluate_jit.1} parent=39 // pred_check_branch
        %304 = sbr.rel (%p302) target = $region44
      $region43: #{_evaluate_jit.1} parent=39 // pred_region
        %305 = vst [vmem:[#allocation2] sm:$0xff] 0.0
        %306 = vst [vmem:[#allocation2 + $0x8] sm:$0xff] 0.0
        %307 = vst [vmem:[#allocation2 + $0x10] sm:$0xff] 0.0
        %308 = vst [vmem:[#allocation2 + $0x18] sm:$0xff] 0.0
        %309 = vst [vmem:[#allocation2 + $0x20] sm:$0xff] 0.0
        %310 = vst [vmem:[#allocation2 + $0x28] sm:$0xff] 0.0
        %311 = vst [vmem:[#allocation2 + $0x30] sm:$0xff] 0.0
        %312 = vst [vmem:[#allocation2 + $0x38] sm:$0xff] 0.0
        %313 = vst [vmem:[#allocation2 + $0x40] sm:$0xff] 0.0
        %314 = vst [vmem:[#allocation2 + $0x48] sm:$0xff] 0.0
        %315 = vst [vmem:[#allocation2 + $0x50] sm:$0xff] 0.0
        %316 = vst [vmem:[#allocation2 + $0x58] sm:$0xff] 0.0
        %317 = vst [vmem:[#allocation2 + $0x60] sm:$0xff] 0.0
        %318 = vst [vmem:[#allocation2 + $0x68] sm:$0xff] 0.0
        %319 = vst [vmem:[#allocation2 + $0x70] sm:$0xff] 0.0
        %320 = vst [vmem:[#allocation2 + $0x78] sm:$0xff] 0.0
      $region44: #{_evaluate_jit.1} parent=39 // pred_fallthru
        _
      %v321 = vld [vmem:[%s282] sm:$0x1]
      %v322 = vld [vmem:[%s287] sm:$0xff]
      %v323 = vld [vmem:[%s287 + $0x8] sm:$0xff]
      %v324 = vld [vmem:[%s287 + $0x10] sm:$0xff]
      %v325 = vld [vmem:[%s287 + $0x18] sm:$0xff]
      %v326 = vld [vmem:[%s287 + $0x20] sm:$0xff]
      %v327 = vld [vmem:[%s287 + $0x28] sm:$0xff]
      %v328 = vld [vmem:[%s287 + $0x30] sm:$0xff]
      %v329 = vld [vmem:[%s287 + $0x38] sm:$0xff]
      %v330 = vld [vmem:[%s287 + $0x40] sm:$0xff]
      %v331 = vld [vmem:[%s287 + $0x48] sm:$0xff]
      %v332 = vld [vmem:[%s287 + $0x50] sm:$0xff]
      %v333 = vld [vmem:[%s287 + $0x58] sm:$0xff]
      %v334 = vld [vmem:[%s287 + $0x60] sm:$0xff]
      %v335 = vld [vmem:[%s287 + $0x68] sm:$0xff]
      %v336 = vld [vmem:[%s287 + $0x70] sm:$0xff]
      %v337 = vld [vmem:[%s287 + $0x78] sm:$0xff]
      %v338 = vld [vmem:[%s292] sm:$0xff]
      %v339 = vld [vmem:[%s292 + $0x8] sm:$0xff]
      %v340 = vld [vmem:[%s292 + $0x10] sm:$0xff]
      %v341 = vld [vmem:[%s292 + $0x18] sm:$0xff]
      %v342 = vld [vmem:[%s292 + $0x20] sm:$0xff]
      %v343 = vld [vmem:[%s292 + $0x28] sm:$0xff]
      %v344 = vld [vmem:[%s292 + $0x30] sm:$0xff]
      %v345 = vld [vmem:[%s292 + $0x38] sm:$0xff]
      %v346 = vld [vmem:[%s292 + $0x40] sm:$0xff]
      %v347 = vld [vmem:[%s292 + $0x48] sm:$0xff]
      %v348 = vld [vmem:[%s292 + $0x50] sm:$0xff]
      %v349 = vld [vmem:[%s292 + $0x58] sm:$0xff]
      %v350 = vld [vmem:[%s292 + $0x60] sm:$0xff]
      %v351 = vld [vmem:[%s292 + $0x68] sm:$0xff]
      %v352 = vld [vmem:[%s292 + $0x70] sm:$0xff]
      %v353 = vld [vmem:[%s292 + $0x78] sm:$0xff]
      %v354 = vlaneseq
      %v355 = vand.u32 %v354, 127
      %s356 = smul.u32 %s21, 128
      %v357 = vstv %s356
      %v358 = vadd.s32 %v355, %v357
      %v360 = vperm.slane %v321, 0
      %363 = vset.pattern.permute.xlu0 0
      %364 = vperm.xlu0 %363, %v322
      %v365 = vpop.permute.xlu0 %364
      %368 = vset.pattern.permute.xlu0 0
      %369 = vperm.xlu0 %368, %v323
      %v370 = vpop.permute.xlu0 %369
      %373 = vset.pattern.permute.xlu0 0
      %374 = vperm.xlu0 %373, %v324
      %v375 = vpop.permute.xlu0 %374
      %378 = vset.pattern.permute.xlu0 0
      %379 = vperm.xlu0 %378, %v325
      %v380 = vpop.permute.xlu0 %379
      %383 = vset.pattern.permute.xlu0 0
      %384 = vperm.xlu0 %383, %v326
      %v385 = vpop.permute.xlu0 %384
      %388 = vset.pattern.permute.xlu0 0
      %389 = vperm.xlu0 %388, %v327
      %v390 = vpop.permute.xlu0 %389
      %393 = vset.pattern.permute.xlu0 0
      %394 = vperm.xlu0 %393, %v328
      %v395 = vpop.permute.xlu0 %394
      %398 = vset.pattern.permute.xlu0 0
      %399 = vperm.xlu0 %398, %v329
      %v400 = vpop.permute.xlu0 %399
      %403 = vset.pattern.permute.xlu0 0
      %404 = vperm.xlu0 %403, %v330
      %v405 = vpop.permute.xlu0 %404
      %408 = vset.pattern.permute.xlu0 0
      %409 = vperm.xlu0 %408, %v331
      %v410 = vpop.permute.xlu0 %409
      %413 = vset.pattern.permute.xlu0 0
      %414 = vperm.xlu0 %413, %v332
      %v415 = vpop.permute.xlu0 %414
      %418 = vset.pattern.permute.xlu0 0
      %419 = vperm.xlu0 %418, %v333
      %v420 = vpop.permute.xlu0 %419
      %423 = vset.pattern.permute.xlu0 0
      %424 = vperm.xlu0 %423, %v334
      %v425 = vpop.permute.xlu0 %424
      %428 = vset.pattern.permute.xlu0 0
      %429 = vperm.xlu0 %428, %v335
      %v430 = vpop.permute.xlu0 %429
      %433 = vset.pattern.permute.xlu0 0
      %434 = vperm.xlu0 %433, %v336
      %v435 = vpop.permute.xlu0 %434
      %438 = vset.pattern.permute.xlu0 0
      %439 = vperm.xlu0 %438, %v337
      %v440 = vpop.permute.xlu0 %439
      %vm442 = vcmp.gt.f32.partialorder %v360, %v365
      %vm443 = vcmp.gt.f32.partialorder %v360, %v370
      %vm444 = vcmp.gt.f32.partialorder %v360, %v375
      %vm445 = vcmp.gt.f32.partialorder %v360, %v380
      %vm446 = vcmp.gt.f32.partialorder %v360, %v385
      %vm447 = vcmp.gt.f32.partialorder %v360, %v390
      %vm448 = vcmp.gt.f32.partialorder %v360, %v395
      %vm449 = vcmp.gt.f32.partialorder %v360, %v400
      %vm450 = vcmp.gt.f32.partialorder %v360, %v405
      %vm451 = vcmp.gt.f32.partialorder %v360, %v410
      %vm452 = vcmp.gt.f32.partialorder %v360, %v415
      %vm453 = vcmp.gt.f32.partialorder %v360, %v420
      %vm454 = vcmp.gt.f32.partialorder %v360, %v425
      %vm455 = vcmp.gt.f32.partialorder %v360, %v430
      %vm456 = vcmp.gt.f32.partialorder %v360, %v435
      %vm457 = vcmp.gt.f32.partialorder %v360, %v440
      %vm458 = vcmp.eq.f32.partialorder %v360, %v365
      %vm459 = vcmp.eq.f32.partialorder %v360, %v370
      %vm460 = vcmp.eq.f32.partialorder %v360, %v375
      %vm461 = vcmp.eq.f32.partialorder %v360, %v380
      %vm462 = vcmp.eq.f32.partialorder %v360, %v385
      %vm463 = vcmp.eq.f32.partialorder %v360, %v390
      %vm464 = vcmp.eq.f32.partialorder %v360, %v395
      %vm465 = vcmp.eq.f32.partialorder %v360, %v400
      %vm466 = vcmp.eq.f32.partialorder %v360, %v405
      %vm467 = vcmp.eq.f32.partialorder %v360, %v410
      %vm468 = vcmp.eq.f32.partialorder %v360, %v415
      %vm469 = vcmp.eq.f32.partialorder %v360, %v420
      %vm470 = vcmp.eq.f32.partialorder %v360, %v425
      %vm471 = vcmp.eq.f32.partialorder %v360, %v430
      %vm472 = vcmp.eq.f32.partialorder %v360, %v435
      %vm473 = vcmp.eq.f32.partialorder %v360, %v440
      %474 = vset.pattern.permute.xlu0 0
      %475 = vperm.xlu0 %474, %v338
      %v476 = vpop.permute.xlu0 %475
      %477 = vset.pattern.permute.xlu0 0
      %478 = vperm.xlu0 %477, %v339
      %v479 = vpop.permute.xlu0 %478
      %480 = vset.pattern.permute.xlu0 0
      %481 = vperm.xlu0 %480, %v340
      %v482 = vpop.permute.xlu0 %481
      %483 = vset.pattern.permute.xlu0 0
      %484 = vperm.xlu0 %483, %v341
      %v485 = vpop.permute.xlu0 %484
      %486 = vset.pattern.permute.xlu0 0
      %487 = vperm.xlu0 %486, %v342
      %v488 = vpop.permute.xlu0 %487
      %489 = vset.pattern.permute.xlu0 0
      %490 = vperm.xlu0 %489, %v343
      %v491 = vpop.permute.xlu0 %490
      %492 = vset.pattern.permute.xlu0 0
      %493 = vperm.xlu0 %492, %v344
      %v494 = vpop.permute.xlu0 %493
      %495 = vset.pattern.permute.xlu0 0
      %496 = vperm.xlu0 %495, %v345
      %v497 = vpop.permute.xlu0 %496
      %498 = vset.pattern.permute.xlu0 0
      %499 = vperm.xlu0 %498, %v346
      %v500 = vpop.permute.xlu0 %499
      %501 = vset.pattern.permute.xlu0 0
      %502 = vperm.xlu0 %501, %v347
      %v503 = vpop.permute.xlu0 %502
      %504 = vset.pattern.permute.xlu0 0
      %505 = vperm.xlu0 %504, %v348
      %v506 = vpop.permute.xlu0 %505
      %507 = vset.pattern.permute.xlu0 0
      %508 = vperm.xlu0 %507, %v349
      %v509 = vpop.permute.xlu0 %508
      %510 = vset.pattern.permute.xlu0 0
      %511 = vperm.xlu0 %510, %v350
      %v512 = vpop.permute.xlu0 %511
      %513 = vset.pattern.permute.xlu0 0
      %514 = vperm.xlu0 %513, %v351
      %v515 = vpop.permute.xlu0 %514
      %516 = vset.pattern.permute.xlu0 0
      %517 = vperm.xlu0 %516, %v352
      %v518 = vpop.permute.xlu0 %517
      %519 = vset.pattern.permute.xlu0 0
      %520 = vperm.xlu0 %519, %v353
      %v521 = vpop.permute.xlu0 %520
      %vm522 = vcmp.lt.s32.totalorder %v358, %v476
      %vm523 = vcmp.lt.s32.totalorder %v358, %v479
      %vm524 = vcmp.lt.s32.totalorder %v358, %v482
      %vm525 = vcmp.lt.s32.totalorder %v358, %v485
      %vm526 = vcmp.lt.s32.totalorder %v358, %v488
      %vm527 = vcmp.lt.s32.totalorder %v358, %v491
      %vm528 = vcmp.lt.s32.totalorder %v358, %v494
      %vm529 = vcmp.lt.s32.totalorder %v358, %v497
      %vm530 = vcmp.lt.s32.totalorder %v358, %v500
      %vm531 = vcmp.lt.s32.totalorder %v358, %v503
      %vm532 = vcmp.lt.s32.totalorder %v358, %v506
      %vm533 = vcmp.lt.s32.totalorder %v358, %v509
      %vm534 = vcmp.lt.s32.totalorder %v358, %v512
      %vm535 = vcmp.lt.s32.totalorder %v358, %v515
      %vm536 = vcmp.lt.s32.totalorder %v358, %v518
      %vm537 = vcmp.lt.s32.totalorder %v358, %v521
      %vm538 = vmand %vm458, %vm522
      %vm539 = vmand %vm459, %vm523
      %vm540 = vmand %vm460, %vm524
      %vm541 = vmand %vm461, %vm525
      %vm542 = vmand %vm462, %vm526
      %vm543 = vmand %vm463, %vm527
      %vm544 = vmand %vm464, %vm528
      %vm545 = vmand %vm465, %vm529
      %vm546 = vmand %vm466, %vm530
      %vm547 = vmand %vm467, %vm531
      %vm548 = vmand %vm468, %vm532
      %vm549 = vmand %vm469, %vm533
      %vm550 = vmand %vm470, %vm534
      %vm551 = vmand %vm471, %vm535
      %vm552 = vmand %vm472, %vm536
      %vm553 = vmand %vm473, %vm537
      %vm554 = vmor %vm442, %vm538
      %vm555 = vmor %vm443, %vm539
      %vm556 = vmor %vm444, %vm540
      %vm557 = vmor %vm445, %vm541
      %vm558 = vmor %vm446, %vm542
      %vm559 = vmor %vm447, %vm543
      %vm560 = vmor %vm448, %vm544
      %vm561 = vmor %vm449, %vm545
      %vm562 = vmor %vm450, %vm546
      %vm563 = vmor %vm451, %vm547
      %vm564 = vmor %vm452, %vm548
      %vm565 = vmor %vm453, %vm549
      %vm566 = vmor %vm454, %vm550
      %vm567 = vmor %vm455, %vm551
      %vm568 = vmor %vm456, %vm552
      %vm569 = vmor %vm457, %vm553
      %v570 = vsel %vm554, 1, 0
      %v571 = vsel %vm555, 1, 0
      %v572 = vsel %vm556, 1, 0
      %v573 = vsel %vm557, 1, 0
      %v574 = vsel %vm558, 1, 0
      %v575 = vsel %vm559, 1, 0
      %v576 = vsel %vm560, 1, 0
      %v577 = vsel %vm561, 1, 0
      %v578 = vsel %vm562, 1, 0
      %v579 = vsel %vm563, 1, 0
      %v580 = vsel %vm564, 1, 0
      %v581 = vsel %vm565, 1, 0
      %v582 = vsel %vm566, 1, 0
      %v583 = vsel %vm567, 1, 0
      %v584 = vsel %vm568, 1, 0
      %v585 = vsel %vm569, 1, 0
      %v586 = vcvt.s32.f32 %v570
      %v587 = vcvt.s32.f32 %v571
      %v588 = vcvt.s32.f32 %v572
      %v589 = vcvt.s32.f32 %v573
      %v590 = vcvt.s32.f32 %v574
      %v591 = vcvt.s32.f32 %v575
      %v592 = vcvt.s32.f32 %v576
      %v593 = vcvt.s32.f32 %v577
      %v594 = vcvt.s32.f32 %v578
      %v595 = vcvt.s32.f32 %v579
      %v596 = vcvt.s32.f32 %v580
      %v597 = vcvt.s32.f32 %v581
      %v598 = vcvt.s32.f32 %v582
      %v599 = vcvt.s32.f32 %v583
      %v600 = vcvt.s32.f32 %v584
      %v601 = vcvt.s32.f32 %v585
      %v602 = vpack.c.bf16 %v587, %v586
      %v603 = vpack.c.bf16 %v589, %v588
      %v604 = vpack.c.bf16 %v591, %v590
      %v605 = vpack.c.bf16 %v593, %v592
      %v606 = vpack.c.bf16 %v595, %v594
      %v607 = vpack.c.bf16 %v597, %v596
      %v608 = vpack.c.bf16 %v599, %v598
      %v609 = vpack.c.bf16 %v601, %v600
      %v610 = vld [vmem:[#allocation2] sm:$0xff]
      %v611 = vld [vmem:[#allocation2 + $0x8] sm:$0xff]
      %v612 = vld [vmem:[#allocation2 + $0x10] sm:$0xff]
      %v613 = vld [vmem:[#allocation2 + $0x18] sm:$0xff]
      %v614 = vld [vmem:[#allocation2 + $0x20] sm:$0xff]
      %v615 = vld [vmem:[#allocation2 + $0x28] sm:$0xff]
      %v616 = vld [vmem:[#allocation2 + $0x30] sm:$0xff]
      %v617 = vld [vmem:[#allocation2 + $0x38] sm:$0xff]
      %v618 = vld [vmem:[#allocation2 + $0x40] sm:$0xff]
      %v619 = vld [vmem:[#allocation2 + $0x48] sm:$0xff]
      %v620 = vld [vmem:[#allocation2 + $0x50] sm:$0xff]
      %v621 = vld [vmem:[#allocation2 + $0x58] sm:$0xff]
      %v622 = vld [vmem:[#allocation2 + $0x60] sm:$0xff]
      %v623 = vld [vmem:[#allocation2 + $0x68] sm:$0xff]
      %v624 = vld [vmem:[#allocation2 + $0x70] sm:$0xff]
      %v625 = vld [vmem:[#allocation2 + $0x78] sm:$0xff]
      %v626 = vld [vmem:[%s4] sm:$0xf]
      %v627 = vld [vmem:[%s4 + $0x4] sm:$0xf]
      %v628 = vld [vmem:[%s4 + $0x8] sm:$0xf]
      %v629 = vld [vmem:[%s4 + $0xc] sm:$0xf]
      %v630 = vld [vmem:[%s4 + $0x10] sm:$0xf]
      %v631 = vld [vmem:[%s4 + $0x14] sm:$0xf]
      %v632 = vld [vmem:[%s4 + $0x18] sm:$0xf]
      %v633 = vld [vmem:[%s4 + $0x1c] sm:$0xf]
      %v634 = vld [vmem:[%s4 + $0x20] sm:$0xf]
      %v635 = vld [vmem:[%s4 + $0x24] sm:$0xf]
      %v636 = vld [vmem:[%s4 + $0x28] sm:$0xf]
      %v637 = vld [vmem:[%s4 + $0x2c] sm:$0xf]
      %v638 = vld [vmem:[%s4 + $0x30] sm:$0xf]
      %v639 = vld [vmem:[%s4 + $0x34] sm:$0xf]
      %v640 = vld [vmem:[%s4 + $0x38] sm:$0xf]
      %v641 = vld [vmem:[%s4 + $0x3c] sm:$0xf]
      %v658 = vunpack.c.l.b16 %v626
      %v659 = vunpack.c.l.b16 %v627
      %v660 = vunpack.c.l.b16 %v628
      %v661 = vunpack.c.l.b16 %v629
      %v662 = vunpack.c.l.b16 %v630
      %v663 = vunpack.c.l.b16 %v631
      %v664 = vunpack.c.l.b16 %v632
      %v665 = vunpack.c.l.b16 %v633
      %v666 = vunpack.c.l.b16 %v634
      %v667 = vunpack.c.l.b16 %v635
      %v668 = vunpack.c.l.b16 %v636
      %v669 = vunpack.c.l.b16 %v637
      %v670 = vunpack.c.l.b16 %v638
      %v671 = vunpack.c.l.b16 %v639
      %v672 = vunpack.c.l.b16 %v640
      %v673 = vunpack.c.l.b16 %v641
      %v674 = vpack.c.b16 %v659, %v658
      %v675 = vpack.c.b16 %v661, %v660
      %v676 = vpack.c.b16 %v663, %v662
      %v677 = vpack.c.b16 %v665, %v664
      %v678 = vpack.c.b16 %v667, %v666
      %v679 = vpack.c.b16 %v669, %v668
      %v680 = vpack.c.b16 %v671, %v670
      %v681 = vpack.c.b16 %v673, %v672
      %690 = vmatpush.bf16.msra.mxu0 %v681
      %691 = vmatpush.bf16.msra.mxu0 %v680
      %692 = vmatpush.bf16.msra.mxu0 %v679
      %693 = vmatpush.bf16.msra.mxu0 %v678
      %694 = vmatpush.bf16.msra.mxu0 %v677
      %695 = vmatpush.bf16.msra.mxu0 %v676
      %696 = vmatpush.bf16.msra.mxu0 %v675
      %697 = vmatpush.bf16.msra.mxu0 %v674
      %698 = vmatmul.bf16.gmra.mxu0 %v602
      %v699 = vpop.f32.mrf.mxu0
      %v700 = vadd.f32 0.0, %v699
      %v701 = vpop.f32.mrf.mxu0
      %v702 = vadd.f32 0.0, %v701
      %703 = vmatmul.bf16.gmra.mxu0 %v603
      %v704 = vpop.f32.mrf.mxu0
      %v705 = vadd.f32 0.0, %v704
      %v706 = vpop.f32.mrf.mxu0
      %v707 = vadd.f32 0.0, %v706
      %708 = vmatmul.bf16.gmra.mxu0 %v604
      %v709 = vpop.f32.mrf.mxu0
      %v710 = vadd.f32 0.0, %v709
      %v711 = vpop.f32.mrf.mxu0
      %v712 = vadd.f32 0.0, %v711
      %713 = vmatmul.bf16.gmra.mxu0 %v605
      %v714 = vpop.f32.mrf.mxu0
      %v715 = vadd.f32 0.0, %v714
      %v716 = vpop.f32.mrf.mxu0
      %v717 = vadd.f32 0.0, %v716
      %718 = vmatmul.bf16.gmra.mxu0 %v606
      %v719 = vpop.f32.mrf.mxu0
      %v720 = vadd.f32 0.0, %v719
      %v721 = vpop.f32.mrf.mxu0
      %v722 = vadd.f32 0.0, %v721
      %723 = vmatmul.bf16.gmra.mxu0 %v607
      %v724 = vpop.f32.mrf.mxu0
      %v725 = vadd.f32 0.0, %v724
      %v726 = vpop.f32.mrf.mxu0
      %v727 = vadd.f32 0.0, %v726
      %728 = vmatmul.bf16.gmra.mxu0 %v608
      %v729 = vpop.f32.mrf.mxu0
      %v730 = vadd.f32 0.0, %v729
      %v731 = vpop.f32.mrf.mxu0
      %v732 = vadd.f32 0.0, %v731
      %733 = vmatmul.bf16.gmra.mxu0 %v609
      %v734 = vpop.f32.mrf.mxu0
      %v735 = vadd.f32 0.0, %v734
      %v736 = vpop.f32.mrf.mxu0
      %v737 = vadd.f32 0.0, %v736
      %738 = vdwg.mxu0
      %v739 = vadd.f32 %v610, %v700
      %v740 = vadd.f32 %v611, %v702
      %v741 = vadd.f32 %v612, %v705
      %v742 = vadd.f32 %v613, %v707
      %v743 = vadd.f32 %v614, %v710
      %v744 = vadd.f32 %v615, %v712
      %v745 = vadd.f32 %v616, %v715
      %v746 = vadd.f32 %v617, %v717
      %v747 = vadd.f32 %v618, %v720
      %v748 = vadd.f32 %v619, %v722
      %v749 = vadd.f32 %v620, %v725
      %v750 = vadd.f32 %v621, %v727
      %v751 = vadd.f32 %v622, %v730
      %v752 = vadd.f32 %v623, %v732
      %v753 = vadd.f32 %v624, %v735
      %v754 = vadd.f32 %v625, %v737
      %755 = vst [vmem:[#allocation2] sm:$0xff] %v739
      %756 = vst [vmem:[#allocation2 + $0x8] sm:$0xff] %v740
      %757 = vst [vmem:[#allocation2 + $0x10] sm:$0xff] %v741
      %758 = vst [vmem:[#allocation2 + $0x18] sm:$0xff] %v742
      %759 = vst [vmem:[#allocation2 + $0x20] sm:$0xff] %v743
      %760 = vst [vmem:[#allocation2 + $0x28] sm:$0xff] %v744
      %761 = vst [vmem:[#allocation2 + $0x30] sm:$0xff] %v745
      %762 = vst [vmem:[#allocation2 + $0x38] sm:$0xff] %v746
      %763 = vst [vmem:[#allocation2 + $0x40] sm:$0xff] %v747
      %764 = vst [vmem:[#allocation2 + $0x48] sm:$0xff] %v748
      %765 = vst [vmem:[#allocation2 + $0x50] sm:$0xff] %v749
      %766 = vst [vmem:[#allocation2 + $0x58] sm:$0xff] %v750
      %767 = vst [vmem:[#allocation2 + $0x60] sm:$0xff] %v751
      %768 = vst [vmem:[#allocation2 + $0x68] sm:$0xff] %v752
      %769 = vst [vmem:[#allocation2 + $0x70] sm:$0xff] %v753
      %770 = vst [vmem:[#allocation2 + $0x78] sm:$0xff] %v754
      %p771 = scmp.eq.s32.totalorder %s21, 2
      // Predicated region
      $region45: #{_evaluate_jit.1} parent=39 // pred_check
        %p772 = pneg %p771
      $region46: #{_evaluate_jit.1} parent=39 // pred_check_branch
        %774 = sbr.rel (%p772) target = $region48
      $region47: #{_evaluate_jit.1} parent=39 // pred_region
        %v775 = vld [vmem:[%s297] sm:$0xff]
        %v776 = vld [vmem:[%s297 + $0x8] sm:$0xff]
        %v777 = vld [vmem:[%s297 + $0x10] sm:$0xff]
        %v778 = vld [vmem:[%s297 + $0x18] sm:$0xff]
        %v779 = vld [vmem:[%s297 + $0x20] sm:$0xff]
        %v780 = vld [vmem:[%s297 + $0x28] sm:$0xff]
        %v781 = vld [vmem:[%s297 + $0x30] sm:$0xff]
        %v782 = vld [vmem:[%s297 + $0x38] sm:$0xff]
        %v783 = vld [vmem:[%s297 + $0x40] sm:$0xff]
        %v784 = vld [vmem:[%s297 + $0x48] sm:$0xff]
        %v785 = vld [vmem:[%s297 + $0x50] sm:$0xff]
        %v786 = vld [vmem:[%s297 + $0x58] sm:$0xff]
        %v787 = vld [vmem:[%s297 + $0x60] sm:$0xff]
        %v788 = vld [vmem:[%s297 + $0x68] sm:$0xff]
        %v789 = vld [vmem:[%s297 + $0x70] sm:$0xff]
        %v790 = vld [vmem:[%s297 + $0x78] sm:$0xff]
        %v791 = vld [vmem:[#allocation2] sm:$0xff]
        %v792 = vld [vmem:[#allocation2 + $0x8] sm:$0xff]
        %v793 = vld [vmem:[#allocation2 + $0x10] sm:$0xff]
        %v794 = vld [vmem:[#allocation2 + $0x18] sm:$0xff]
        %v795 = vld [vmem:[#allocation2 + $0x20] sm:$0xff]
        %v796 = vld [vmem:[#allocation2 + $0x28] sm:$0xff]
        %v797 = vld [vmem:[#allocation2 + $0x30] sm:$0xff]
        %v798 = vld [vmem:[#allocation2 + $0x38] sm:$0xff]
        %v799 = vld [vmem:[#allocation2 + $0x40] sm:$0xff]
        %v800 = vld [vmem:[#allocation2 + $0x48] sm:$0xff]
        %v801 = vld [vmem:[#allocation2 + $0x50] sm:$0xff]
        %v802 = vld [vmem:[#allocation2 + $0x58] sm:$0xff]
        %v803 = vld [vmem:[#allocation2 + $0x60] sm:$0xff]
        %v804 = vld [vmem:[#allocation2 + $0x68] sm:$0xff]
        %v805 = vld [vmem:[#allocation2 + $0x70] sm:$0xff]
        %v806 = vld [vmem:[#allocation2 + $0x78] sm:$0xff]
        %v807 = vadd.f32 %v791, 1.0
        %v808 = vadd.f32 %v792, 1.0
        %v809 = vadd.f32 %v793, 1.0
        %v810 = vadd.f32 %v794, 1.0
        %v811 = vadd.f32 %v795, 1.0
        %v812 = vadd.f32 %v796, 1.0
        %v813 = vadd.f32 %v797, 1.0
        %v814 = vadd.f32 %v798, 1.0
        %v815 = vadd.f32 %v799, 1.0
        %v816 = vadd.f32 %v800, 1.0
        %v817 = vadd.f32 %v801, 1.0
        %v818 = vadd.f32 %v802, 1.0
        %v819 = vadd.f32 %v803, 1.0
        %v820 = vadd.f32 %v804, 1.0
        %v821 = vadd.f32 %v805, 1.0
        %v822 = vadd.f32 %v806, 1.0
        %vm823 = vcmask 7168
        %v824 = vsel %vm823, %v775, 0.0
        %v825 = vsel %vm823, %v776, 0.0
        %v826 = vadd.f32 %v824, %v825
        %v827 = vsel %vm823, %v777, 0.0
        %v828 = vadd.f32 %v826, %v827
        %v829 = vsel %vm823, %v778, 0.0
        %v830 = vadd.f32 %v828, %v829
        %v831 = vsel %vm823, %v779, 0.0
        %v832 = vadd.f32 %v830, %v831
        %v833 = vsel %vm823, %v780, 0.0
        %v834 = vadd.f32 %v832, %v833
        %v835 = vsel %vm823, %v781, 0.0
        %v836 = vadd.f32 %v834, %v835
        %v837 = vsel %vm823, %v782, 0.0
        %v838 = vadd.f32 %v836, %v837
        %v839 = vsel %vm823, %v783, 0.0
        %v840 = vadd.f32 %v838, %v839
        %v841 = vsel %vm823, %v784, 0.0
        %v842 = vadd.f32 %v840, %v841
        %v843 = vsel %vm823, %v785, 0.0
        %v844 = vadd.f32 %v842, %v843
        %v845 = vsel %vm823, %v786, 0.0
        %v846 = vadd.f32 %v844, %v845
        %v847 = vsel %vm823, %v787, 0.0
        %v848 = vadd.f32 %v846, %v847
        %v849 = vsel %vm823, %v788, 0.0
        %v850 = vadd.f32 %v848, %v849
        %v851 = vsel %vm823, %v789, 0.0
        %v852 = vadd.f32 %v850, %v851
        %v853 = vsel %vm823, %v790, 0.0
        %v854 = vadd.f32 %v852, %v853
        %855 = vadd.xlane.f32.xlu0 %v854
        %v856 = vpop.xlane.xlu0 %855
        %v857 = vrot.slane %v856, 4
        %v858 = vadd.f32 %v856, %v857
        %v859 = vrot.slane %v858, 2
        %v860 = vadd.f32 %v858, %v859
        %v861 = vrot.slane %v860, 1
        %v862 = vadd.f32 %v860, %v861
        %s863 = vtos %v862
        %vm864 = vcmp.gt.f32.partialorder %v775, 0.5
        %vm865 = vcmp.gt.f32.partialorder %v776, 0.5
        %vm866 = vcmp.gt.f32.partialorder %v777, 0.5
        %vm867 = vcmp.gt.f32.partialorder %v778, 0.5
        %vm868 = vcmp.gt.f32.partialorder %v779, 0.5
        %vm869 = vcmp.gt.f32.partialorder %v780, 0.5
        %vm870 = vcmp.gt.f32.partialorder %v781, 0.5
        %vm871 = vcmp.gt.f32.partialorder %v782, 0.5
        %vm872 = vcmp.gt.f32.partialorder %v783, 0.5
        %vm873 = vcmp.gt.f32.partialorder %v784, 0.5
        %vm874 = vcmp.gt.f32.partialorder %v785, 0.5
        %vm875 = vcmp.gt.f32.partialorder %v786, 0.5
        %vm876 = vcmp.gt.f32.partialorder %v787, 0.5
        %vm877 = vcmp.gt.f32.partialorder %v788, 0.5
        %vm878 = vcmp.gt.f32.partialorder %v789, 0.5
        %vm879 = vcmp.gt.f32.partialorder %v790, 0.5
        %v880 = vsel %vm864, %v807, 1e+30
        %v881 = vsel %vm865, %v808, 1e+30
        %v882 = vsel %vm866, %v809, 1e+30
        %v883 = vsel %vm867, %v810, 1e+30
        %v884 = vsel %vm868, %v811, 1e+30
        %v885 = vsel %vm869, %v812, 1e+30
        %v886 = vsel %vm870, %v813, 1e+30
        %v887 = vsel %vm871, %v814, 1e+30
        %v888 = vsel %vm872, %v815, 1e+30
        %v889 = vsel %vm873, %v816, 1e+30
        %v890 = vsel %vm874, %v817, 1e+30
        %v891 = vsel %vm875, %v818, 1e+30
        %v892 = vsel %vm876, %v819, 1e+30
        %v893 = vsel %vm877, %v820, 1e+30
        %v894 = vsel %vm878, %v821, 1e+30
        %v895 = vsel %vm879, %v822, 1e+30
        %v896 = vsel %vm823, %v880, inf
        %v897 = vsel %vm823, %v881, inf
        %v898 = vsel %vm823, %v882, inf
        %v899 = vsel %vm823, %v883, inf
        %v900 = vsel %vm823, %v884, inf
        %v901 = vmin.f32 %v896, %v900
        %v902 = vsel %vm823, %v885, inf
        %v903 = vmin.f32 %v897, %v902
        %v904 = vsel %vm823, %v886, inf
        %v905 = vmin.f32 %v898, %v904
        %v906 = vsel %vm823, %v887, inf
        %v907 = vmin.f32 %v899, %v906
        %v908 = vsel %vm823, %v888, inf
        %v909 = vmin.f32 %v901, %v908
        %v910 = vsel %vm823, %v889, inf
        %v911 = vmin.f32 %v903, %v910
        %v912 = vsel %vm823, %v890, inf
        %v913 = vmin.f32 %v905, %v912
        %v914 = vsel %vm823, %v891, inf
        %v915 = vmin.f32 %v907, %v914
        %v916 = vsel %vm823, %v892, inf
        %v917 = vmin.f32 %v909, %v916
        %v918 = vsel %vm823, %v893, inf
        %v919 = vmin.f32 %v911, %v918
        %v920 = vsel %vm823, %v894, inf
        %v921 = vmin.f32 %v913, %v920
        %v922 = vsel %vm823, %v895, inf
        %v923 = vmin.f32 %v915, %v922
        %v924 = vmin.f32 %v917, %v919
        %v925 = vmin.f32 %v921, %v923
        %v926 = vmin.f32 %v924, %v925
        %927 = vmin.xlane.f32.xlu0 %v926
        %v928 = vpop.xlane.xlu0 %927
        %v929 = vrot.slane %v928, 4
        %v930 = vmin.f32 %v928, %v929
        %v931 = vrot.slane %v930, 2
        %v932 = vmin.f32 %v930, %v931
        %v933 = vrot.slane %v932, 1
        %v934 = vmin.f32 %v932, %v933
        %s935 = vtos %v934
        %p936 = scmp.gt.f32.partialorder %s863, 0.5
        %v937 = vstv %s935
        %v938 = vrcp.pop %v937
        %v939 = vmul.f32 %v937, %v938
        %v940 = vsub.f32 1.0, %v939
        %v941 = vmul.f32 %v938, %v940
        %v942 = vadd.f32 %v938, %v941
        %vm943 = vweird.f32 %v937
        %vm944 = vweird.f32 %v938
        %vm945 = vmor %vm943, %vm944
        %v946 = vsel %vm945, %v938, %v942
        %v947 = vand.u32 2147483647, %v937
        %vm948 = vcmp.eq.f32.partialorder %v947, 8.507059e+37
        %v949 = vand.u32 %v937, 2147483648
        %v950 = vor.u32 1.1754944e-38, %v949
        %v951 = vsel %vm948, %v950, %v946
        %s952 = vtos %v951
        %s953 = scalar_select %p936, %s952, 0.0
        %p954 = scmp.le.f32.partialorder %s935, 3.0
        %p955 = pnand %p936, %p954
        %p956 = pneg %p955
        %s957 = scalar_select %p956, 1.0, 0.0
        %vm958 = vcmp.le.f32.partialorder %v807, 20.0
        %vm959 = vcmp.le.f32.partialorder %v808, 20.0
        %vm960 = vcmp.le.f32.partialorder %v809, 20.0
        %vm961 = vcmp.le.f32.partialorder %v810, 20.0
        %vm962 = vcmp.le.f32.partialorder %v811, 20.0
        %vm963 = vcmp.le.f32.partialorder %v812, 20.0
        %vm964 = vcmp.le.f32.partialorder %v813, 20.0
        %vm965 = vcmp.le.f32.partialorder %v814, 20.0
        %vm966 = vcmp.le.f32.partialorder %v815, 20.0
        %vm967 = vcmp.le.f32.partialorder %v816, 20.0
        %vm968 = vcmp.le.f32.partialorder %v817, 20.0
        %vm969 = vcmp.le.f32.partialorder %v818, 20.0
        %vm970 = vcmp.le.f32.partialorder %v819, 20.0
        %vm971 = vcmp.le.f32.partialorder %v820, 20.0
        %vm972 = vcmp.le.f32.partialorder %v821, 20.0
        %vm973 = vcmp.le.f32.partialorder %v822, 20.0
        %v974 = vsel %vm958, 1, 0
        %v975 = vsel %vm959, 1, 0
        %v976 = vsel %vm960, 1, 0
        %v977 = vsel %vm961, 1, 0
        %v978 = vsel %vm962, 1, 0
        %v979 = vsel %vm963, 1, 0
        %v980 = vsel %vm964, 1, 0
        %v981 = vsel %vm965, 1, 0
        %v982 = vsel %vm966, 1, 0
        %v983 = vsel %vm967, 1, 0
        %v984 = vsel %vm968, 1, 0
        %v985 = vsel %vm969, 1, 0
        %v986 = vsel %vm970, 1, 0
        %v987 = vsel %vm971, 1, 0
        %v988 = vsel %vm972, 1, 0
        %v989 = vsel %vm973, 1, 0
        %v990 = vcvt.s32.f32 %v974
        %v991 = vcvt.s32.f32 %v975
        %v992 = vcvt.s32.f32 %v976
        %v993 = vcvt.s32.f32 %v977
        %v994 = vcvt.s32.f32 %v978
        %v995 = vcvt.s32.f32 %v979
        %v996 = vcvt.s32.f32 %v980
        %v997 = vcvt.s32.f32 %v981
        %v998 = vcvt.s32.f32 %v982
        %v999 = vcvt.s32.f32 %v983
        %v1000 = vcvt.s32.f32 %v984
        %v1001 = vcvt.s32.f32 %v985
        %v1002 = vcvt.s32.f32 %v986
        %v1003 = vcvt.s32.f32 %v987
        %v1004 = vcvt.s32.f32 %v988
        %v1005 = vcvt.s32.f32 %v989
        %v1006 = vmul.f32 %v775, %v990
        %v1007 = vmul.f32 %v776, %v991
        %v1008 = vmul.f32 %v777, %v992
        %v1009 = vmul.f32 %v778, %v993
        %v1010 = vmul.f32 %v779, %v994
        %v1011 = vmul.f32 %v780, %v995
        %v1012 = vmul.f32 %v781, %v996
        %v1013 = vmul.f32 %v782, %v997
        %v1014 = vmul.f32 %v783, %v998
        %v1015 = vmul.f32 %v784, %v999
        %v1016 = vmul.f32 %v785, %v1000
        %v1017 = vmul.f32 %v786, %v1001
        %v1018 = vmul.f32 %v787, %v1002
        %v1019 = vmul.f32 %v788, %v1003
        %v1020 = vmul.f32 %v789, %v1004
        %v1021 = vmul.f32 %v790, %v1005
        %v1022 = vsel %vm823, %v1006, 0.0
        %v1023 = vsel %vm823, %v1007, 0.0
        %v1024 = vadd.f32 %v1022, %v1023
        %v1025 = vsel %vm823, %v1008, 0.0
        %v1026 = vadd.f32 %v1024, %v1025
        %v1027 = vsel %vm823, %v1009, 0.0
        %v1028 = vadd.f32 %v1026, %v1027
        %v1029 = vsel %vm823, %v1010, 0.0
        %v1030 = vadd.f32 %v1028, %v1029
        %v1031 = vsel %vm823, %v1011, 0.0
        %v1032 = vadd.f32 %v1030, %v1031
        %v1033 = vsel %vm823, %v1012, 0.0
        %v1034 = vadd.f32 %v1032, %v1033
        %v1035 = vsel %vm823, %v1013, 0.0
        %v1036 = vadd.f32 %v1034, %v1035
        %v1037 = vsel %vm823, %v1014, 0.0
        %v1038 = vadd.f32 %v1036, %v1037
        %v1039 = vsel %vm823, %v1015, 0.0
        %v1040 = vadd.f32 %v1038, %v1039
        %v1041 = vsel %vm823, %v1016, 0.0
        %v1042 = vadd.f32 %v1040, %v1041
        %v1043 = vsel %vm823, %v1017, 0.0
        %v1044 = vadd.f32 %v1042, %v1043
        %v1045 = vsel %vm823, %v1018, 0.0
        %v1046 = vadd.f32 %v1044, %v1045
        %v1047 = vsel %vm823, %v1019, 0.0
        %v1048 = vadd.f32 %v1046, %v1047
        %v1049 = vsel %vm823, %v1020, 0.0
        %v1050 = vadd.f32 %v1048, %v1049
        %v1051 = vsel %vm823, %v1021, 0.0
        %v1052 = vadd.f32 %v1050, %v1051
        %1053 = vadd.xlane.f32.xlu0 %v1052
        %v1054 = vpop.xlane.xlu0 %1053
        %v1055 = vrot.slane %v1054, 4
        %v1056 = vadd.f32 %v1054, %v1055
        %v1057 = vrot.slane %v1056, 2
        %v1058 = vadd.f32 %v1056, %v1057
        %v1059 = vrot.slane %v1058, 1
        %v1060 = vadd.f32 %v1058, %v1059
        %s1061 = vtos %v1060
        %s1062 = smax.f32 %s863, 1.0
        %v1063 = vstv %s1062
        %v1064 = vrcp.pop %v1063
        %v1065 = vmul.f32 %v1063, %v1064
        %v1066 = vsub.f32 1.0, %v1065
        %v1067 = vmul.f32 %v1064, %v1066
        %v1068 = vadd.f32 %v1064, %v1067
        %vm1069 = vweird.f32 %v1063
        %vm1070 = vweird.f32 %v1064
        %vm1071 = vmor %vm1069, %vm1070
        %v1072 = vsel %vm1071, %v1064, %v1068
        %v1073 = vand.u32 2147483647, %v1063
        %vm1074 = vcmp.eq.f32.partialorder %v1073, 8.507059e+37
        %v1075 = vand.u32 %v1063, 2147483648
        %v1076 = vor.u32 1.1754944e-38, %v1075
        %v1077 = vsel %vm1074, %v1076, %v1072
        %s1078 = vtos %v1077
        %s1079 = smul.f32 %s1061, %s1078
        %s1080 = scalar_select %p936, %s1079, 0.0
        %vm1081 = vcmp.eq.s32.totalorder %v355, 0
        %vm1082 = vcmp.eq.s32.totalorder %v355, 1
        %vm1083 = vcmp.eq.s32.totalorder %v355, 2
        %v1084 = vstv %s1080
        %v1085 = vsel %vm1083, %v1084, 0.0
        %v1086 = vstv %s957
        %v1087 = vsel %vm1082, %v1086, %v1085
        %v1088 = vstv %s953
        %v1089 = vsel %vm1081, %v1088, %v1087
        %1090 = vst [vmem:[%s300] sm:$0x1] %v1089
      $region48: #{_evaluate_jit.1} parent=39 // pred_fallthru
        _
      %p1091 = scmp.lt.s32.totalorder %s20, 2
      %s1092 = scalar_select %p1091, %s20, 2
      %s1093 = scalar_lea.vmem %s5, %s1092
      // Predicated region
      $region49: #{_evaluate_jit.1} parent=39 // pred_check
        %p1094 = pneg %p173
      $region50: #{_evaluate_jit.1} parent=39 // pred_check_branch
        %1096 = sbr.rel (%p1094) target = $region52
      $region51: #{_evaluate_jit.1} parent=39 // pred_region
        _
      $region52: #{_evaluate_jit.1} parent=39 // pred_fallthru
        _
    $region40: #{_evaluate_jit.1} parent=5 // pred_fallthru
      _
    %p1097 = scmp.le.s32.totalorder 2, %s11
    // Predicated region
    $region53: #{_evaluate_jit.1} parent=5 // pred_check
      %p1098 = pneg %p1097
    $region54: #{_evaluate_jit.1} parent=5 // pred_check_branch
      %1100 = sbr.rel (%p1098) target = $region56
    $region55: #{_evaluate_jit.1} parent=5 // pred_region
      %s1101 = ssub.s32 %s11, 2
      // Predicated region
      $region57: #{_evaluate_jit.1} parent=55 // pred_check
        %p1102 = pneg %p179
      $region58: #{_evaluate_jit.1} parent=55 // pred_check_branch
        %1104 = sbr.rel (%p1102) target = $region60
      $region59: #{_evaluate_jit.1} parent=55 // pred_region
        %p1105 = scmp.lt.s32.totalorder %s22, 2
        %s1106 = scalar_select %p1105, %s22, 2
        %s1107 = scalar_lea.vmem %s5, %s1106
      $region60: #{_evaluate_jit.1} parent=55 // pred_fallthru
        _
    $region56: #{_evaluate_jit.1} parent=5 // pred_fallthru
      _
  $region6: #{_evaluate_jit.1} parent=0 // loop_footer
    %s15 = sadd.s32 1, %s11
  $region7: #{_evaluate_jit.1} parent=0 // loop_footer_branch
    %10 = sbr.rel target = $region3
  $region8: #{_evaluate_jit.1} parent=0 // loop_exit
    _

</llo_original>
